<compile_context>
chip_gen: v7x
topology: tpu7x:2x2x1
jax: 0.10.0
libtpu: 0.0.40
codegen_flags: <defaults>
</compile_context>

<pallas_src>
import jax
import jax.numpy as jnp
from jax.experimental import pallas as pl
from jax.experimental.pallas import tpu as pltpu

LN_EPS = 1e-5  # torch.nn.LayerNorm default


def _gelu_exact(x):
    # nn.GELU() default = exact erf formulation (kept for exact semantics).
    return 0.5 * x * (1.0 + jax.lax.erf(x * (1.0 / jnp.sqrt(2.0).astype(x.dtype))))


def _layer_norm(x, gamma, beta):
    # LayerNorm over the last axis (ch_dim), eps=1e-5, elementwise affine (f32).
    mu = jnp.mean(x, axis=-1, keepdims=True)
    xc = x - mu
    var = jnp.mean(xc * xc, axis=-1, keepdims=True)
    inv = jax.lax.rsqrt(var + LN_EPS)
    return xc * inv * gamma + beta


def mixer_kernel(
    x_ref,                    # (Bt, N, D)  f32
    ln1_g_ref, ln1_b_ref,     # (1, D) f32
    w1_ref, b1_ref,           # (Ht, N) bf16, (Ht, 1) f32   token-mix Linear 1
    w2_ref, b2_ref,           # (N, Ht) bf16, (N, 1) f32    token-mix Linear 2
    ln2_g_ref, ln2_b_ref,     # (1, D) f32
    w3_ref, b3_ref,           # (Hc, D) bf16, (1, Hc) f32   channel-mix Linear 1
    w4_ref, b4_ref,           # (D, Hc) bf16, (1, D) f32    channel-mix Linear 2
    o_ref,                    # (Bt, N, D)
    xmid_ref,                 # VMEM scratch (Bt, N, D) f32 (after token-mix residual)
):
    Bt, N, D = x_ref.shape
    x = x_ref[...].astype(jnp.float32)

    # ---------------- token mix (transpose-free formulation) ----------------
    y = _layer_norm(x, ln1_g_ref[...], ln1_b_ref[...])          # (Bt, N, D) f32
    yb = y.astype(w1_ref.dtype)                                  # bf16 MXU inputs
    w1 = w1_ref[...]
    w2 = w2_ref[...]
    b1 = b1_ref[...]                                             # (Ht, 1)
    b2 = b2_ref[...]                                             # (N, 1)
    # Bt is a small static constant -> unrolls into plain 2-D MXU matmuls,
    # D stays on the lane axis, no activation transpose, no weight transpose.
    for b in range(Bt):
        hT = jnp.dot(w1, yb[b], preferred_element_type=jnp.float32) + b1   # (Ht, D)
        hT = _gelu_exact(hT)
        tT = jnp.dot(w2, hT.astype(w2_ref.dtype),
                     preferred_element_type=jnp.float32) + b2              # (N, D)
        xmid_ref[b] = x[b] + tT                                            # residual

    xm = xmid_ref[...]                                           # (Bt, N, D) f32

    # ---------------- channel mix ----------------
    y2 = _layer_norm(xm, ln2_g_ref[...], ln2_b_ref[...])        # (Bt, N, D) f32
    y2f = y2.reshape(Bt * N, D).astype(w3_ref.dtype)            # one big 2-D matmul
    # dot_general contracting the last axes: weights used exactly as stored.
    h2 = jax.lax.dot_general(y2f, w3_ref[...], (((1,), (1,)), ((), ())),
                             preferred_element_type=jnp.float32) + b3_ref[...]  # (Bt*N, Hc)
    h2 = _gelu_exact(h2).astype(w4_ref.dtype)
    c = jax.lax.dot_general(h2, w4_ref[...], (((1,), (1,)), ((), ())),
                            preferred_element_type=jnp.float32) + b4_ref[...]   # (Bt*N, D)
    o_ref[...] = (xm + c.reshape(Bt, N, D)).astype(o_ref.dtype)


def mixer_layer(x, params, *, batch_block=8):
    """x: (B, N, D) float32; params: dict of f32 weights (see init_params)."""
    B, N, D = x.shape
    Ht = params["w1"].shape[0]
    Hc = params["w3"].shape[0]

    # Largest block of batch rows <= batch_block that divides B.
    Bt = 1
    for cand in range(min(B, batch_block), 0, -1):
        if B % cand == 0:
            Bt = cand
            break
    grid = (B // Bt,)

    # Ship matmul weights as bf16 (MXU-native; halves weight VMEM); biases and
    # LN params stay f32 and are pre-shaped for direct broadcast in-kernel.
    bf = jnp.bfloat16
    w1 = params["w1"].astype(bf)          # (Ht, N)
    w2 = params["w2"].astype(bf)          # (N, Ht)
    w3 = params["w3"].astype(bf)          # (Hc, D)
    w4 = params["w4"].astype(bf)          # (D, Hc)
    b1 = params["b1"].reshape(Ht, 1).astype(jnp.float32)
    b2 = params["b2"].reshape(N, 1).astype(jnp.float32)
    b3 = params["b3"].reshape(1, Hc).astype(jnp.float32)
    b4 = params["b4"].reshape(1, D).astype(jnp.float32)
    ln1_g = params["ln1_g"].astype(jnp.float32)
    ln1_b = params["ln1_b"].astype(jnp.float32)
    ln2_g = params["ln2_g"].astype(jnp.float32)
    ln2_b = params["ln2_b"].astype(jnp.float32)

    def whole(a):
        # Whole (small) parameter array, same block at every grid step.
        return pl.BlockSpec(a.shape, lambda b: (0, 0))

    grid_spec = pltpu.PrefetchScalarGridSpec(
        num_scalar_prefetch=0,
        grid=grid,
        in_specs=[
            pl.BlockSpec((Bt, N, D), lambda b: (b, 0, 0)),    # x block of Bt rows
            whole(ln1_g), whole(ln1_b),
            whole(w1), whole(b1),
            whole(w2), whole(b2),
            whole(ln2_g), whole(ln2_b),
            whole(w3), whole(b3),
            whole(w4), whole(b4),
        ],
        out_specs=pl.BlockSpec((Bt, N, D), lambda b: (b, 0, 0)),
        scratch_shapes=[pltpu.VMEM((Bt, N, D), jnp.float32)],
    )

    return pl.pallas_call(
        mixer_kernel,
        out_shape=jax.ShapeDtypeStruct((B, N, D), x.dtype),
        grid_spec=grid_spec,
        compiler_params=pltpu.CompilerParams(
            dimension_semantics=("parallel",),       # batch blocks are independent
            vmem_limit_bytes=64 * 1024 * 1024,       # explicit budget (<= physical on v5e/v6e/v7x)
        ),
    )(
        x,
        ln1_g, ln1_b,
        w1, b1, w2, b2,
        ln2_g, ln2_b,
        w3, b3, w4, b4,
    )


def init_params(key, token_dim, ch_dim, token_hdim, ch_hdim, dtype=jnp.float32):
    """Deterministic synthetic parameter init matching the nn.Module shapes.

    nn.Linear(in, out): weight (out, in), bias (out,). LayerNorm(ch_dim): gamma=1, beta=0.
    1-D params are stored as (1, dim) for TPU-friendly 2-D layout.
    """
    ks = jax.random.split(key, 8)

    def lin(kw, kb, out_f, in_f):
        bound = 1.0 / jnp.sqrt(in_f)
        w = jax.random.uniform(kw, (out_f, in_f), dtype, -bound, bound)
        b = jax.random.uniform(kb, (1, out_f), dtype, -bound, bound)
        return w, b

    w1, b1 = lin(ks[0], ks[1], token_hdim, token_dim)
    w2, b2 = lin(ks[2], ks[3], token_dim, token_hdim)
    w3, b3 = lin(ks[4], ks[5], ch_hdim, ch_dim)
    w4, b4 = lin(ks[6], ks[7], ch_dim, ch_hdim)

    return {
        "ln1_g": jnp.ones((1, ch_dim), dtype), "ln1_b": jnp.zeros((1, ch_dim), dtype),
        "w1": w1, "b1": b1, "w2": w2, "b2": b2,
        "ln2_g": jnp.ones((1, ch_dim), dtype), "ln2_b": jnp.zeros((1, ch_dim), dtype),
        "w3": w3, "b3": b3, "w4": w4, "b4": b4,
    }


def mixer_layer_ref(x, p):
    """Pure-JAX f32 reference of MixerLayer.forward (exact module semantics)."""
    def ln(v, g, b):
        mu = jnp.mean(v, -1, keepdims=True)
        var = jnp.mean((v - mu) ** 2, -1, keepdims=True)
        return (v - mu) / jnp.sqrt(var + LN_EPS) * g + b

    def gelu(v):
        return 0.5 * v * (1.0 + jax.lax.erf(v / jnp.sqrt(2.0)))

    y = ln(x, p["ln1_g"], p["ln1_b"])
    z = jnp.swapaxes(y, 1, 2)                                    # (B, D, N)
    t = gelu(z @ p["w1"].T + p["b1"][0]) @ p["w2"].T + p["b2"][0]
    x = x + jnp.swapaxes(t, 1, 2)
    y2 = ln(x, p["ln2_g"], p["ln2_b"])
    c = gelu(y2 @ p["w3"].T + p["b3"][0]) @ p["w4"].T + p["b4"][0]
    return x + c


def mixer_layer_ref_bf16(x, p):
    """Reference mirroring the kernel's bf16-operand / f32-accumulate matmuls."""
    bf = jnp.bfloat16

    def ln(v, g, b):
        mu = jnp.mean(v, -1, keepdims=True)
        var = jnp.mean((v - mu) ** 2, -1, keepdims=True)
        return (v - mu) * jax.lax.rsqrt(var + LN_EPS) * g + b

    def gelu(v):
        return 0.5 * v * (1.0 + jax.lax.erf(v / jnp.sqrt(2.0)))

    w1, w2, w3, w4 = (p[k].astype(bf) for k in ("w1", "w2", "w3", "w4"))
    y = ln(x, p["ln1_g"], p["ln1_b"]).astype(bf)
    hT = jnp.einsum("hn,bnd->bhd", w1, y,
                    preferred_element_type=jnp.float32) + p["b1"][0][None, :, None]
    hT = gelu(hT).astype(bf)
    tT = jnp.einsum("nh,bhd->bnd", w2, hT,
                    preferred_element_type=jnp.float32) + p["b2"][0][None, :, None]
    x = x + tT
    y2 = ln(x, p["ln2_g"], p["ln2_b"]).astype(bf)
    h2 = jnp.einsum("bnd,hd->bnh", y2, w3,
                    preferred_element_type=jnp.float32) + p["b3"][0]
    h2 = gelu(h2).astype(bf)
    c = jnp.einsum("bnh,dh->bnd", h2, w4,
                   preferred_element_type=jnp.float32) + p["b4"][0]
    return x + c


if __name__ == "__main__":
    # small shapes consistent with the module: x is (batch, token_dim, ch_dim)
    B, token_dim, ch_dim = 2, 8, 32
    token_hdim, ch_hdim = 16, 64

    key = jax.random.PRNGKey(0)
    kx, kp = jax.random.split(key)
    x = jax.random.normal(kx, (B, token_dim, ch_dim), jnp.float32)
    params = init_params(kp, token_dim, ch_dim, token_hdim, ch_hdim)

    out = jax.block_until_ready(mixer_layer(x, params))

    ref32 = mixer_layer_ref(x, params)
    refbf = mixer_layer_ref_bf16(x, params)
    assert out.shape == ref32.shape == (B, token_dim, ch_dim)
    # semantic check vs exact-f32 module math (loose: bf16 MXU inputs)
    assert jnp.allclose(out, ref32, atol=5e-2, rtol=5e-2), (
        f"max |diff| vs f32 ref = {jnp.max(jnp.abs(out - ref32))}")
    # tight check vs a reference with the same bf16-in / f32-accumulate matmuls
    assert jnp.allclose(out, refbf, atol=2e-3, rtol=2e-3), (
        f"max |diff| vs bf16 ref = {jnp.max(jnp.abs(out - refbf))}")

    print("KERNEL_OK")
</pallas_src>

<mosaic_0001>
module attributes {stable_mosaic.version = 11 : i64} {
  func.func @mixer_kernel(%arg0: i32, %arg1: memref<2x8x32xf32, #tpu.memory_space<vmem>>, %arg2: memref<1x32xf32, #tpu.memory_space<vmem>>, %arg3: memref<1x32xf32, #tpu.memory_space<vmem>>, %arg4: memref<16x8xbf16, #tpu.memory_space<vmem>>, %arg5: memref<16x1xf32, #tpu.memory_space<vmem>>, %arg6: memref<8x16xbf16, #tpu.memory_space<vmem>>, %arg7: memref<8x1xf32, #tpu.memory_space<vmem>>, %arg8: memref<1x32xf32, #tpu.memory_space<vmem>>, %arg9: memref<1x32xf32, #tpu.memory_space<vmem>>, %arg10: memref<64x32xbf16, #tpu.memory_space<vmem>>, %arg11: memref<1x64xf32, #tpu.memory_space<vmem>>, %arg12: memref<32x64xbf16, #tpu.memory_space<vmem>>, %arg13: memref<1x32xf32, #tpu.memory_space<vmem>>, %arg14: memref<2x8x32xf32, #tpu.memory_space<vmem>>, %arg15: memref<2x8x32xf32, #tpu.memory_space<vmem>>) attributes {dimension_semantics = [#tpu.dimension_semantics<parallel>], iteration_bounds = array<i64: 1>, scalar_prefetch = 0 : i64, scratch_operands = 1 : i64, tpu.core_type = #tpu.core_type<tc>, window_params = [{transform_indices = @transform_0, window_bounds = array<i64: 2, 8, 32>}, {pipeline_mode = #tpu.pipeline_mode<synchronous>, transform_indices = @transform_1, window_bounds = array<i64: 1, 32>}, {pipeline_mode = #tpu.pipeline_mode<synchronous>, transform_indices = @transform_2, window_bounds = array<i64: 1, 32>}, {pipeline_mode = #tpu.pipeline_mode<synchronous>, transform_indices = @transform_3, window_bounds = array<i64: 16, 8>}, {pipeline_mode = #tpu.pipeline_mode<synchronous>, transform_indices = @transform_4, window_bounds = array<i64: 16, 1>}, {pipeline_mode = #tpu.pipeline_mode<synchronous>, transform_indices = @transform_5, window_bounds = array<i64: 8, 16>}, {pipeline_mode = #tpu.pipeline_mode<synchronous>, transform_indices = @transform_6, window_bounds = array<i64: 8, 1>}, {pipeline_mode = #tpu.pipeline_mode<synchronous>, transform_indices = @transform_7, window_bounds = array<i64: 1, 32>}, {pipeline_mode = #tpu.pipeline_mode<synchronous>, transform_indices = @transform_8, window_bounds = array<i64: 1, 32>}, {pipeline_mode = #tpu.pipeline_mode<synchronous>, transform_indices = @transform_9, window_bounds = array<i64: 64, 32>}, {pipeline_mode = #tpu.pipeline_mode<synchronous>, transform_indices = @transform_10, window_bounds = array<i64: 1, 64>}, {pipeline_mode = #tpu.pipeline_mode<synchronous>, transform_indices = @transform_11, window_bounds = array<i64: 32, 64>}, {pipeline_mode = #tpu.pipeline_mode<synchronous>, transform_indices = @transform_12, window_bounds = array<i64: 1, 32>}, {transform_indices = @transform_13, window_bounds = array<i64: 2, 8, 32>}]} {
    %c0 = arith.constant 0 : index
    %c0_0 = arith.constant 0 : index
    %c0_1 = arith.constant 0 : index
    %0 = vector.load %arg1[%c0, %c0_0, %c0_1] : memref<2x8x32xf32, #tpu.memory_space<vmem>>, vector<2x8x32xf32>
    %c0_2 = arith.constant 0 : index
    %c0_3 = arith.constant 0 : index
    %1 = vector.load %arg2[%c0_2, %c0_3] : memref<1x32xf32, #tpu.memory_space<vmem>>, vector<1x32xf32>
    %c0_4 = arith.constant 0 : index
    %c0_5 = arith.constant 0 : index
    %2 = vector.load %arg3[%c0_4, %c0_5] : memref<1x32xf32, #tpu.memory_space<vmem>>, vector<1x32xf32>
    %cst = arith.constant dense<0.000000e+00> : vector<2x8xf32>
    %3 = vector.multi_reduction <add>, %0, %cst [2] : vector<2x8x32xf32> to vector<2x8xf32>
    %4 = vector.shape_cast %3 : vector<2x8xf32> to vector<2x8x1xf32>
    %cst_6 = arith.constant 3.200000e+01 : f32
    %5 = vector.broadcast %cst_6 : f32 to vector<2x8x1xf32>
    %6 = arith.divf %4, %5 : vector<2x8x1xf32>
    %7 = vector.broadcast %6 : vector<2x8x1xf32> to vector<2x8x32xf32>
    %8 = arith.subf %0, %7 : vector<2x8x32xf32>
    %9 = arith.mulf %8, %8 : vector<2x8x32xf32>
    %cst_7 = arith.constant dense<0.000000e+00> : vector<2x8xf32>
    %10 = vector.multi_reduction <add>, %9, %cst_7 [2] : vector<2x8x32xf32> to vector<2x8xf32>
    %11 = vector.shape_cast %10 : vector<2x8xf32> to vector<2x8x1xf32>
    %cst_8 = arith.constant 3.200000e+01 : f32
    %12 = vector.broadcast %cst_8 : f32 to vector<2x8x1xf32>
    %13 = arith.divf %11, %12 : vector<2x8x1xf32>
    %cst_9 = arith.constant 9.99999974E-6 : f32
    %14 = vector.broadcast %cst_9 : f32 to vector<2x8x1xf32>
    %15 = arith.addf %13, %14 : vector<2x8x1xf32>
    %16 = math.rsqrt %15 : vector<2x8x1xf32>
    %17 = vector.broadcast %16 : vector<2x8x1xf32> to vector<2x8x32xf32>
    %18 = arith.mulf %8, %17 : vector<2x8x32xf32>
    %19 = vector.shape_cast %1 : vector<1x32xf32> to vector<1x1x32xf32>
    %20 = vector.broadcast %19 : vector<1x1x32xf32> to vector<2x8x32xf32>
    %21 = arith.mulf %18, %20 : vector<2x8x32xf32>
    %22 = vector.shape_cast %2 : vector<1x32xf32> to vector<1x1x32xf32>
    %23 = vector.broadcast %22 : vector<1x1x32xf32> to vector<2x8x32xf32>
    %24 = arith.addf %21, %23 : vector<2x8x32xf32>
    %25 = arith.truncf %24 : vector<2x8x32xf32> to vector<2x8x32xbf16>
    %c0_10 = arith.constant 0 : index
    %c0_11 = arith.constant 0 : index
    %26 = vector.load %arg4[%c0_10, %c0_11] : memref<16x8xbf16, #tpu.memory_space<vmem>>, vector<16x8xbf16>
    %c0_12 = arith.constant 0 : index
    %c0_13 = arith.constant 0 : index
    %27 = vector.load %arg6[%c0_12, %c0_13] : memref<8x16xbf16, #tpu.memory_space<vmem>>, vector<8x16xbf16>
    %c0_14 = arith.constant 0 : index
    %c0_15 = arith.constant 0 : index
    %28 = vector.load %arg5[%c0_14, %c0_15] : memref<16x1xf32, #tpu.memory_space<vmem>>, vector<16x1xf32>
    %c0_16 = arith.constant 0 : index
    %c0_17 = arith.constant 0 : index
    %29 = vector.load %arg7[%c0_16, %c0_17] : memref<8x1xf32, #tpu.memory_space<vmem>>, vector<8x1xf32>
    %30 = vector.extract_strided_slice %25 {offsets = [0, 0, 0], sizes = [1, 8, 32], strides = [1, 1, 1]} : vector<2x8x32xbf16> to vector<1x8x32xbf16>
    %31 = vector.shape_cast %30 : vector<1x8x32xbf16> to vector<8x32xbf16>
    %cst_18 = arith.constant dense<0.000000e+00> : vector<16x32xf32>
    %32 = tpu.matmul %26, %31, %cst_18 {dimension_numbers = #tpu.dot_dimension_numbers<[1], [0], [0], [1], [0, 0, 1, 1], [], []>} : vector<16x8xbf16>, vector<8x32xbf16>, vector<16x32xf32> -> vector<16x32xf32>
    %33 = vector.broadcast %28 : vector<16x1xf32> to vector<16x32xf32>
    %34 = arith.addf %32, %33 : vector<16x32xf32>
    %cst_19 = arith.constant 5.000000e-01 : f32
    %35 = vector.broadcast %cst_19 : f32 to vector<16x32xf32>
    %36 = arith.mulf %35, %34 : vector<16x32xf32>
    %cst_20 = arith.constant 2.000000e+00 : f32
    %37 = math.sqrt %cst_20 : f32
    %cst_21 = arith.constant 1.000000e+00 : f32
    %38 = arith.divf %cst_21, %37 : f32
    %39 = vector.broadcast %38 : f32 to vector<16x32xf32>
    %40 = arith.mulf %34, %39 : vector<16x32xf32>
    %41 = math.erf %40 : vector<16x32xf32>
    %cst_22 = arith.constant 1.000000e+00 : f32
    %42 = vector.broadcast %cst_22 : f32 to vector<16x32xf32>
    %43 = arith.addf %42, %41 : vector<16x32xf32>
    %44 = arith.mulf %36, %43 : vector<16x32xf32>
    %45 = arith.truncf %44 : vector<16x32xf32> to vector<16x32xbf16>
    %cst_23 = arith.constant dense<0.000000e+00> : vector<8x32xf32>
    %46 = tpu.matmul %27, %45, %cst_23 {dimension_numbers = #tpu.dot_dimension_numbers<[1], [0], [0], [1], [0, 0, 1, 1], [], []>} : vector<8x16xbf16>, vector<16x32xbf16>, vector<8x32xf32> -> vector<8x32xf32>
    %47 = vector.broadcast %29 : vector<8x1xf32> to vector<8x32xf32>
    %48 = arith.addf %46, %47 : vector<8x32xf32>
    %49 = vector.extract_strided_slice %0 {offsets = [0, 0, 0], sizes = [1, 8, 32], strides = [1, 1, 1]} : vector<2x8x32xf32> to vector<1x8x32xf32>
    %50 = vector.shape_cast %49 : vector<1x8x32xf32> to vector<8x32xf32>
    %51 = arith.addf %50, %48 : vector<8x32xf32>
    %c0_24 = arith.constant 0 : index
    %c0_25 = arith.constant 0 : index
    %c0_26 = arith.constant 0 : index
    %52 = vector.load %arg15[%c0_24, %c0_25, %c0_26] : memref<2x8x32xf32, #tpu.memory_space<vmem>>, vector<1x8x32xf32>
    %53 = vector.shape_cast %52 : vector<1x8x32xf32> to vector<8x32xf32>
    %54 = vector.shape_cast %51 : vector<8x32xf32> to vector<1x8x32xf32>
    tpu.vector_store %arg15[%c0_24, %c0_25, %c0_26], %54 {strides = array<i32>} : memref<2x8x32xf32, #tpu.memory_space<vmem>>, vector<1x8x32xf32>,
    %55 = vector.extract_strided_slice %25 {offsets = [1, 0, 0], sizes = [1, 8, 32], strides = [1, 1, 1]} : vector<2x8x32xbf16> to vector<1x8x32xbf16>
    %56 = vector.shape_cast %55 : vector<1x8x32xbf16> to vector<8x32xbf16>
    %cst_27 = arith.constant dense<0.000000e+00> : vector<16x32xf32>
    %57 = tpu.matmul %26, %56, %cst_27 {dimension_numbers = #tpu.dot_dimension_numbers<[1], [0], [0], [1], [0, 0, 1, 1], [], []>} : vector<16x8xbf16>, vector<8x32xbf16>, vector<16x32xf32> -> vector<16x32xf32>
    %58 = vector.broadcast %28 : vector<16x1xf32> to vector<16x32xf32>
    %59 = arith.addf %57, %58 : vector<16x32xf32>
    %cst_28 = arith.constant 5.000000e-01 : f32
    %60 = vector.broadcast %cst_28 : f32 to vector<16x32xf32>
    %61 = arith.mulf %60, %59 : vector<16x32xf32>
    %cst_29 = arith.constant 2.000000e+00 : f32
    %62 = math.sqrt %cst_29 : f32
    %cst_30 = arith.constant 1.000000e+00 : f32
    %63 = arith.divf %cst_30, %62 : f32
    %64 = vector.broadcast %63 : f32 to vector<16x32xf32>
    %65 = arith.mulf %59, %64 : vector<16x32xf32>
    %66 = math.erf %65 : vector<16x32xf32>
    %cst_31 = arith.constant 1.000000e+00 : f32
    %67 = vector.broadcast %cst_31 : f32 to vector<16x32xf32>
    %68 = arith.addf %67, %66 : vector<16x32xf32>
    %69 = arith.mulf %61, %68 : vector<16x32xf32>
    %70 = arith.truncf %69 : vector<16x32xf32> to vector<16x32xbf16>
    %cst_32 = arith.constant dense<0.000000e+00> : vector<8x32xf32>
    %71 = tpu.matmul %27, %70, %cst_32 {dimension_numbers = #tpu.dot_dimension_numbers<[1], [0], [0], [1], [0, 0, 1, 1], [], []>} : vector<8x16xbf16>, vector<16x32xbf16>, vector<8x32xf32> -> vector<8x32xf32>
    %72 = vector.broadcast %29 : vector<8x1xf32> to vector<8x32xf32>
    %73 = arith.addf %71, %72 : vector<8x32xf32>
    %74 = vector.extract_strided_slice %0 {offsets = [1, 0, 0], sizes = [1, 8, 32], strides = [1, 1, 1]} : vector<2x8x32xf32> to vector<1x8x32xf32>
    %75 = vector.shape_cast %74 : vector<1x8x32xf32> to vector<8x32xf32>
    %76 = arith.addf %75, %73 : vector<8x32xf32>
    %c1 = arith.constant 1 : index
    %c0_33 = arith.constant 0 : index
    %c0_34 = arith.constant 0 : index
    %77 = vector.load %arg15[%c1, %c0_33, %c0_34] : memref<2x8x32xf32, #tpu.memory_space<vmem>>, vector<1x8x32xf32>
    %78 = vector.shape_cast %77 : vector<1x8x32xf32> to vector<8x32xf32>
    %79 = vector.shape_cast %76 : vector<8x32xf32> to vector<1x8x32xf32>
    tpu.vector_store %arg15[%c1, %c0_33, %c0_34], %79 {strides = array<i32>} : memref<2x8x32xf32, #tpu.memory_space<vmem>>, vector<1x8x32xf32>,
    %c0_35 = arith.constant 0 : index
    %c0_36 = arith.constant 0 : index
    %c0_37 = arith.constant 0 : index
    %80 = vector.load %arg15[%c0_35, %c0_36, %c0_37] : memref<2x8x32xf32, #tpu.memory_space<vmem>>, vector<2x8x32xf32>
    %c0_38 = arith.constant 0 : index
    %c0_39 = arith.constant 0 : index
    %81 = vector.load %arg8[%c0_38, %c0_39] : memref<1x32xf32, #tpu.memory_space<vmem>>, vector<1x32xf32>
    %c0_40 = arith.constant 0 : index
    %c0_41 = arith.constant 0 : index
    %82 = vector.load %arg9[%c0_40, %c0_41] : memref<1x32xf32, #tpu.memory_space<vmem>>, vector<1x32xf32>
    %cst_42 = arith.constant dense<0.000000e+00> : vector<2x8xf32>
    %83 = vector.multi_reduction <add>, %80, %cst_42 [2] : vector<2x8x32xf32> to vector<2x8xf32>
    %84 = vector.shape_cast %83 : vector<2x8xf32> to vector<2x8x1xf32>
    %cst_43 = arith.constant 3.200000e+01 : f32
    %85 = vector.broadcast %cst_43 : f32 to vector<2x8x1xf32>
    %86 = arith.divf %84, %85 : vector<2x8x1xf32>
    %87 = vector.broadcast %86 : vector<2x8x1xf32> to vector<2x8x32xf32>
    %88 = arith.subf %80, %87 : vector<2x8x32xf32>
    %89 = arith.mulf %88, %88 : vector<2x8x32xf32>
    %cst_44 = arith.constant dense<0.000000e+00> : vector<2x8xf32>
    %90 = vector.multi_reduction <add>, %89, %cst_44 [2] : vector<2x8x32xf32> to vector<2x8xf32>
    %91 = vector.shape_cast %90 : vector<2x8xf32> to vector<2x8x1xf32>
    %cst_45 = arith.constant 3.200000e+01 : f32
    %92 = vector.broadcast %cst_45 : f32 to vector<2x8x1xf32>
    %93 = arith.divf %91, %92 : vector<2x8x1xf32>
    %cst_46 = arith.constant 9.99999974E-6 : f32
    %94 = vector.broadcast %cst_46 : f32 to vector<2x8x1xf32>
    %95 = arith.addf %93, %94 : vector<2x8x1xf32>
    %96 = math.rsqrt %95 : vector<2x8x1xf32>
    %97 = vector.broadcast %96 : vector<2x8x1xf32> to vector<2x8x32xf32>
    %98 = arith.mulf %88, %97 : vector<2x8x32xf32>
    %99 = vector.shape_cast %81 : vector<1x32xf32> to vector<1x1x32xf32>
    %100 = vector.broadcast %99 : vector<1x1x32xf32> to vector<2x8x32xf32>
    %101 = arith.mulf %98, %100 : vector<2x8x32xf32>
    %102 = vector.shape_cast %82 : vector<1x32xf32> to vector<1x1x32xf32>
    %103 = vector.broadcast %102 : vector<1x1x32xf32> to vector<2x8x32xf32>
    %104 = arith.addf %101, %103 : vector<2x8x32xf32>
    %105 = vector.shape_cast %104 : vector<2x8x32xf32> to vector<16x32xf32>
    %106 = arith.truncf %105 : vector<16x32xf32> to vector<16x32xbf16>
    %c0_47 = arith.constant 0 : index
    %c0_48 = arith.constant 0 : index
    %107 = vector.load %arg10[%c0_47, %c0_48] : memref<64x32xbf16, #tpu.memory_space<vmem>>, vector<64x32xbf16>
    %cst_49 = arith.constant dense<0.000000e+00> : vector<16x64xf32>
    %108 = tpu.matmul %106, %107, %cst_49 {dimension_numbers = #tpu.dot_dimension_numbers<[1], [1], [0], [0], [0, 0, 1, 0], [], []>} : vector<16x32xbf16>, vector<64x32xbf16>, vector<16x64xf32> -> vector<16x64xf32>
    %c0_50 = arith.constant 0 : index
    %c0_51 = arith.constant 0 : index
    %109 = vector.load %arg11[%c0_50, %c0_51] : memref<1x64xf32, #tpu.memory_space<vmem>>, vector<1x64xf32>
    %110 = vector.broadcast %109 : vector<1x64xf32> to vector<16x64xf32>
    %111 = arith.addf %108, %110 : vector<16x64xf32>
    %cst_52 = arith.constant 5.000000e-01 : f32
    %112 = vector.broadcast %cst_52 : f32 to vector<16x64xf32>
    %113 = arith.mulf %112, %111 : vector<16x64xf32>
    %cst_53 = arith.constant 2.000000e+00 : f32
    %114 = math.sqrt %cst_53 : f32
    %cst_54 = arith.constant 1.000000e+00 : f32
    %115 = arith.divf %cst_54, %114 : f32
    %116 = vector.broadcast %115 : f32 to vector<16x64xf32>
    %117 = arith.mulf %111, %116 : vector<16x64xf32>
    %118 = math.erf %117 : vector<16x64xf32>
    %cst_55 = arith.constant 1.000000e+00 : f32
    %119 = vector.broadcast %cst_55 : f32 to vector<16x64xf32>
    %120 = arith.addf %119, %118 : vector<16x64xf32>
    %121 = arith.mulf %113, %120 : vector<16x64xf32>
    %122 = arith.truncf %121 : vector<16x64xf32> to vector<16x64xbf16>
    %c0_56 = arith.constant 0 : index
    %c0_57 = arith.constant 0 : index
    %123 = vector.load %arg12[%c0_56, %c0_57] : memref<32x64xbf16, #tpu.memory_space<vmem>>, vector<32x64xbf16>
    %cst_58 = arith.constant dense<0.000000e+00> : vector<16x32xf32>
    %124 = tpu.matmul %122, %123, %cst_58 {dimension_numbers = #tpu.dot_dimension_numbers<[1], [1], [0], [0], [0, 0, 1, 0], [], []>} : vector<16x64xbf16>, vector<32x64xbf16>, vector<16x32xf32> -> vector<16x32xf32>
    %c0_59 = arith.constant 0 : index
    %c0_60 = arith.constant 0 : index
    %125 = vector.load %arg13[%c0_59, %c0_60] : memref<1x32xf32, #tpu.memory_space<vmem>>, vector<1x32xf32>
    %126 = vector.broadcast %125 : vector<1x32xf32> to vector<16x32xf32>
    %127 = arith.addf %124, %126 : vector<16x32xf32>
    %128 = vector.shape_cast %127 : vector<16x32xf32> to vector<2x8x32xf32>
    %129 = arith.addf %80, %128 : vector<2x8x32xf32>
    %c0_61 = arith.constant 0 : index
    %c0_62 = arith.constant 0 : index
    %c0_63 = arith.constant 0 : index
    %130 = vector.load %arg14[%c0_61, %c0_62, %c0_63] : memref<2x8x32xf32, #tpu.memory_space<vmem>>, vector<2x8x32xf32>
    tpu.vector_store %arg14[%c0_61, %c0_62, %c0_63], %129 {strides = array<i32>} : memref<2x8x32xf32, #tpu.memory_space<vmem>>, vector<2x8x32xf32>,
    return
  }
  func.func @transform_0(%arg0: i32) -> (i32, i32, i32) {
    %c0_i32 = arith.constant 0 : i32
    %c0_i32_0 = arith.constant 0 : i32
    %c0_i32_1 = arith.constant 0 : i32
    return %arg0, %c0_i32, %c0_i32_0 : i32, i32, i32
  }
  func.func @transform_1(%arg0: i32) -> (i32, i32) {
    %c0_i32 = arith.constant 0 : i32
    %c0_i32_0 = arith.constant 0 : i32
    %c0_i32_1 = arith.constant 0 : i32
    return %c0_i32, %c0_i32_0 : i32, i32
  }
  func.func @transform_2(%arg0: i32) -> (i32, i32) {
    %c0_i32 = arith.constant 0 : i32
    %c0_i32_0 = arith.constant 0 : i32
    %c0_i32_1 = arith.constant 0 : i32
    return %c0_i32, %c0_i32_0 : i32, i32
  }
  func.func @transform_3(%arg0: i32) -> (i32, i32) {
    %c0_i32 = arith.constant 0 : i32
    %c0_i32_0 = arith.constant 0 : i32
    %c0_i32_1 = arith.constant 0 : i32
    return %c0_i32, %c0_i32_0 : i32, i32
  }
  func.func @transform_4(%arg0: i32) -> (i32, i32) {
    %c0_i32 = arith.constant 0 : i32
    %c0_i32_0 = arith.constant 0 : i32
    %c0_i32_1 = arith.constant 0 : i32
    return %c0_i32, %c0_i32_0 : i32, i32
  }
  func.func @transform_5(%arg0: i32) -> (i32, i32) {
    %c0_i32 = arith.constant 0 : i32
    %c0_i32_0 = arith.constant 0 : i32
    %c0_i32_1 = arith.constant 0 : i32
    return %c0_i32, %c0_i32_0 : i32, i32
  }
  func.func @transform_6(%arg0: i32) -> (i32, i32) {
    %c0_i32 = arith.constant 0 : i32
    %c0_i32_0 = arith.constant 0 : i32
    %c0_i32_1 = arith.constant 0 : i32
    return %c0_i32, %c0_i32_0 : i32, i32
  }
  func.func @transform_7(%arg0: i32) -> (i32, i32) {
    %c0_i32 = arith.constant 0 : i32
    %c0_i32_0 = arith.constant 0 : i32
    %c0_i32_1 = arith.constant 0 : i32
    return %c0_i32, %c0_i32_0 : i32, i32
  }
  func.func @transform_8(%arg0: i32) -> (i32, i32) {
    %c0_i32 = arith.constant 0 : i32
    %c0_i32_0 = arith.constant 0 : i32
    %c0_i32_1 = arith.constant 0 : i32
    return %c0_i32, %c0_i32_0 : i32, i32
  }
  func.func @transform_9(%arg0: i32) -> (i32, i32) {
    %c0_i32 = arith.constant 0 : i32
    %c0_i32_0 = arith.constant 0 : i32
    %c0_i32_1 = arith.constant 0 : i32
    return %c0_i32, %c0_i32_0 : i32, i32
  }
  func.func @transform_10(%arg0: i32) -> (i32, i32) {
    %c0_i32 = arith.constant 0 : i32
    %c0_i32_0 = arith.constant 0 : i32
    %c0_i32_1 = arith.constant 0 : i32
    return %c0_i32, %c0_i32_0 : i32, i32
  }
  func.func @transform_11(%arg0: i32) -> (i32, i32) {
    %c0_i32 = arith.constant 0 : i32
    %c0_i32_0 = arith.constant 0 : i32
    %c0_i32_1 = arith.constant 0 : i32
    return %c0_i32, %c0_i32_0 : i32, i32
  }
  func.func @transform_12(%arg0: i32) -> (i32, i32) {
    %c0_i32 = arith.constant 0 : i32
    %c0_i32_0 = arith.constant 0 : i32
    %c0_i32_1 = arith.constant 0 : i32
    return %c0_i32, %c0_i32_0 : i32, i32
  }
  func.func @transform_13(%arg0: i32) -> (i32, i32, i32) {
    %c0_i32 = arith.constant 0 : i32
    %c0_i32_0 = arith.constant 0 : i32
    %c0_i32_1 = arith.constant 0 : i32
    return %arg0, %c0_i32, %c0_i32_0 : i32, i32, i32
  }
}

</mosaic_0001>

<llo_original>
// kernel: tpu_custom_call.1
$region0: #{tpu_custom_call.1}
  #allocation0 [shape = 'u32[]', space=smem, size = 0x4, offset = 0x4, fixed_abs, tag = 'smem constant byte address 0x4 - core index']
  #allocation1 [shape = 'u32[144,128]{1,0:T(1,128)}', space=vmem, size = 0x12000, scoped, tag = 'internal scratch']
  #allocation2 [shape = 'f32[2,8,32]{2,1,0:T(8,128)}', space=vmem, size = 0x2000, scoped, tag = 'scratch operand']
  %s0 = inlined_call_operand.hbm [shape: f32[2,8,32], index: 0, kind: input, shape index: {}]
  %s1 = inlined_call_operand.hbm [shape: f32[1,32], index: 1, kind: input, shape index: {}]
  %s2 = inlined_call_operand.hbm [shape: f32[1,32], index: 2, kind: input, shape index: {}]
  %s3 = inlined_call_operand.hbm [shape: bf16[16,8], index: 3, kind: input, shape index: {}]
  %s4 = inlined_call_operand.hbm [shape: f32[16,1], index: 4, kind: input, shape index: {}]
  %s5 = inlined_call_operand.hbm [shape: bf16[8,16], index: 5, kind: input, shape index: {}]
  %s6 = inlined_call_operand.hbm [shape: f32[8,1], index: 6, kind: input, shape index: {}]
  %s7 = inlined_call_operand.hbm [shape: f32[1,32], index: 7, kind: input, shape index: {}]
  %s8 = inlined_call_operand.hbm [shape: f32[1,32], index: 8, kind: input, shape index: {}]
  %s9 = inlined_call_operand.hbm [shape: bf16[64,32], index: 9, kind: input, shape index: {}]
  %s10 = inlined_call_operand.hbm [shape: f32[1,64], index: 10, kind: input, shape index: {}]
  %s11 = inlined_call_operand.hbm [shape: bf16[32,64], index: 11, kind: input, shape index: {}]
  %s12 = inlined_call_operand.hbm [shape: f32[1,32], index: 12, kind: input, shape index: {}]
  %s13 = inlined_call_operand.hbm [shape: f32[2,8,32], index: 13, kind: output, shape index: {}]
  %s14 = sld [smem:[#allocation0]]
  $region114: #{tpu_custom_call.1} parent=0
    _
  %s16 = ssub.s32 1, %s14
  %s17 = scalar_select 0, %s16, %s14
  $region1: #{tpu_custom_call.1} parent=0
    #allocation3 [shape = 'u8[8192]{0}', space=vmem, size = 0x2000, scoped, tag = 'input window, operand 0, single buffered']
    #allocation4 [shape = 's32[1]{0}', space=sflag, size = 0x4, scoped, tag = 'scoped memory for tpu_custom_call.1']
    #allocation5 [shape = 's32[1]{0}', space=sflag, size = 0x4, scoped, tag = 'scoped memory for tpu_custom_call.1']
    #allocation6 [shape = 'u8[512]{0}', space=vmem, size = 0x400, scoped, tag = 'input window, operand 1, single buffered']
    #allocation7 [shape = 's32[1]{0}', space=sflag, size = 0x4, scoped, tag = 'scoped memory for tpu_custom_call.1']
    #allocation8 [shape = 'u8[512]{0}', space=vmem, size = 0x400, scoped, tag = 'input window, operand 2, single buffered']
    #allocation9 [shape = 'u8[4096]{0}', space=vmem, size = 0x1000, scoped, tag = 'input window, operand 3, single buffered']
    #allocation10 [shape = 's32[1]{0}', space=sflag, size = 0x4, scoped, tag = 'scoped memory for tpu_custom_call.1']
    #allocation11 [shape = 'u8[8192]{0}', space=vmem, size = 0x2000, scoped, tag = 'input window, operand 4, single buffered']
    #allocation12 [shape = 'u8[2048]{0}', space=vmem, size = 0x800, scoped, tag = 'input window, operand 5, single buffered']
    #allocation13 [shape = 's32[1]{0}', space=sflag, size = 0x4, scoped, tag = 'scoped memory for tpu_custom_call.1']
    #allocation14 [shape = 'u8[4096]{0}', space=vmem, size = 0x1000, scoped, tag = 'input window, operand 6, single buffered']
    #allocation15 [shape = 'u8[512]{0}', space=vmem, size = 0x400, scoped, tag = 'input window, operand 7, single buffered']
    #allocation16 [shape = 's32[1]{0}', space=sflag, size = 0x4, scoped, tag = 'scoped memory for tpu_custom_call.1']
    #allocation17 [shape = 'u8[512]{0}', space=vmem, size = 0x400, scoped, tag = 'input window, operand 8, single buffered']
    #allocation18 [shape = 'u8[16384]{0}', space=vmem, size = 0x4000, scoped, tag = 'input window, operand 9, single buffered']
    #allocation19 [shape = 's32[1]{0}', space=sflag, size = 0x4, scoped, tag = 'scoped memory for tpu_custom_call.1']
    #allocation20 [shape = 'u8[512]{0}', space=vmem, size = 0x400, scoped, tag = 'input window, operand 10, single buffered']
    #allocation21 [shape = 'u8[8192]{0}', space=vmem, size = 0x2000, scoped, tag = 'input window, operand 11, single buffered']
    #allocation22 [shape = 's32[1]{0}', space=sflag, size = 0x4, scoped, tag = 'scoped memory for tpu_custom_call.1']
    #allocation23 [shape = 'u8[512]{0}', space=vmem, size = 0x400, scoped, tag = 'input window, operand 12, single buffered']
    #allocation24 [shape = 'u8[8192]{0}', space=vmem, size = 0x2000, scoped, tag = 'output window, operand 0, single buffered']
    %18 = vsyncpa [#allocation4], 0
    %19 = vsyncpa [#allocation7], 0
    %20 = vsyncpa [#allocation10], 0
    %21 = vsyncpa [#allocation13], 0
    %22 = vsyncpa [#allocation16], 0
    %23 = vsyncpa [#allocation19], 0
    %24 = vsyncpa [#allocation22], 0
    %25 = vsyncpa [#allocation5], 0
    // Predicated region
    $region2: #{tpu_custom_call.1} parent=1 // pred_check
      _
    $region3: #{tpu_custom_call.1} parent=1 // pred_check_branch
      %27 = sbr.rel (0) target = $region5
    $region4: #{tpu_custom_call.1} parent=1 // pred_region
      %s29 = ssub.s32 256, 256
      %30 = vsyncadd [#allocation4], %s29
      %s31 = sshll.u32 [#allocation3], 4
      %s32 = int_to_ptr.vmem [resolvable:$true] %s31
      %37 = dma.hbm_to_vmem [thread:$0]  %s0, 256, %s32, [#allocation4], 128, 128, 8
    $region5: #{tpu_custom_call.1} parent=1 // pred_fallthru
      _
    // Predicated region
    $region6: #{tpu_custom_call.1} parent=1 // pred_check
      _
    $region7: #{tpu_custom_call.1} parent=1 // pred_check_branch
      %39 = sbr.rel (0) target = $region9
    $region8: #{tpu_custom_call.1} parent=1 // pred_region
      %s41 = ssub.s32 16, 16
      %42 = vsyncadd [#allocation7], %s41
      %s44 = sshll.u32 [#allocation6], 4
      %s45 = int_to_ptr.vmem [resolvable:$true] %s44
      %47 = dma.hbm_to_vmem [thread:$0]  %s1, 16, %s45, [#allocation7]
    $region9: #{tpu_custom_call.1} parent=1 // pred_fallthru
      _
    // Predicated region
    $region10: #{tpu_custom_call.1} parent=1 // pred_check
      _
    $region11: #{tpu_custom_call.1} parent=1 // pred_check_branch
      %49 = sbr.rel (0) target = $region13
    $region12: #{tpu_custom_call.1} parent=1 // pred_region
      %s51 = ssub.s32 16, 16
      %52 = vsyncadd [#allocation7], %s51
      %s54 = sshll.u32 [#allocation8], 4
      %s55 = int_to_ptr.vmem [resolvable:$true] %s54
      %57 = dma.hbm_to_vmem [thread:$0]  %s2, 16, %s55, [#allocation7]
    $region13: #{tpu_custom_call.1} parent=1 // pred_fallthru
      _
    // Predicated region
    $region14: #{tpu_custom_call.1} parent=1 // pred_check
      _
    $region15: #{tpu_custom_call.1} parent=1 // pred_check_branch
      %59 = sbr.rel (0) target = $region17
    $region16: #{tpu_custom_call.1} parent=1 // pred_region
      %s61 = ssub.s32 128, 128
      %62 = vsyncadd [#allocation10], %s61
      %s63 = sshll.u32 [#allocation9], 4
      %s64 = int_to_ptr.vmem [resolvable:$true] %s63
      %69 = dma.hbm_to_vmem [thread:$0]  %s3, 128, %s64, [#allocation10], 64, 64, 4
    $region17: #{tpu_custom_call.1} parent=1 // pred_fallthru
      _
    // Predicated region
    $region18: #{tpu_custom_call.1} parent=1 // pred_check
      _
    $region19: #{tpu_custom_call.1} parent=1 // pred_check_branch
      %71 = sbr.rel (0) target = $region21
    $region20: #{tpu_custom_call.1} parent=1 // pred_region
      %s73 = ssub.s32 256, 256
      %74 = vsyncadd [#allocation10], %s73
      %s75 = sshll.u32 [#allocation11], 4
      %s76 = int_to_ptr.vmem [resolvable:$true] %s75
      %81 = dma.hbm_to_vmem [thread:$0]  %s4, 256, %s76, [#allocation10], 128, 128, 8
    $region21: #{tpu_custom_call.1} parent=1 // pred_fallthru
      _
    // Predicated region
    $region22: #{tpu_custom_call.1} parent=1 // pred_check
      _
    $region23: #{tpu_custom_call.1} parent=1 // pred_check_branch
      %83 = sbr.rel (0) target = $region25
    $region24: #{tpu_custom_call.1} parent=1 // pred_region
      %s85 = ssub.s32 64, 64
      %86 = vsyncadd [#allocation13], %s85
      %s88 = sshll.u32 [#allocation12], 4
      %s89 = int_to_ptr.vmem [resolvable:$true] %s88
      %91 = dma.hbm_to_vmem [thread:$0]  %s5, 64, %s89, [#allocation13]
    $region25: #{tpu_custom_call.1} parent=1 // pred_fallthru
      _
    // Predicated region
    $region26: #{tpu_custom_call.1} parent=1 // pred_check
      _
    $region27: #{tpu_custom_call.1} parent=1 // pred_check_branch
      %93 = sbr.rel (0) target = $region29
    $region28: #{tpu_custom_call.1} parent=1 // pred_region
      %s95 = ssub.s32 128, 128
      %96 = vsyncadd [#allocation13], %s95
      %s98 = sshll.u32 [#allocation14], 4
      %s99 = int_to_ptr.vmem [resolvable:$true] %s98
      %101 = dma.hbm_to_vmem [thread:$0]  %s6, 128, %s99, [#allocation13]
    $region29: #{tpu_custom_call.1} parent=1 // pred_fallthru
      _
    // Predicated region
    $region30: #{tpu_custom_call.1} parent=1 // pred_check
      _
    $region31: #{tpu_custom_call.1} parent=1 // pred_check_branch
      %103 = sbr.rel (0) target = $region33
    $region32: #{tpu_custom_call.1} parent=1 // pred_region
      %s105 = ssub.s32 16, 16
      %106 = vsyncadd [#allocation16], %s105
      %s108 = sshll.u32 [#allocation15], 4
      %s109 = int_to_ptr.vmem [resolvable:$true] %s108
      %111 = dma.hbm_to_vmem [thread:$0]  %s7, 16, %s109, [#allocation16]
    $region33: #{tpu_custom_call.1} parent=1 // pred_fallthru
      _
    // Predicated region
    $region34: #{tpu_custom_call.1} parent=1 // pred_check
      _
    $region35: #{tpu_custom_call.1} parent=1 // pred_check_branch
      %113 = sbr.rel (0) target = $region37
    $region36: #{tpu_custom_call.1} parent=1 // pred_region
      %s115 = ssub.s32 16, 16
      %116 = vsyncadd [#allocation16], %s115
      %s118 = sshll.u32 [#allocation17], 4
      %s119 = int_to_ptr.vmem [resolvable:$true] %s118
      %121 = dma.hbm_to_vmem [thread:$0]  %s8, 16, %s119, [#allocation16]
    $region37: #{tpu_custom_call.1} parent=1 // pred_fallthru
      _
    // Predicated region
    $region38: #{tpu_custom_call.1} parent=1 // pred_check
      _
    $region39: #{tpu_custom_call.1} parent=1 // pred_check_branch
      %123 = sbr.rel (0) target = $region41
    $region40: #{tpu_custom_call.1} parent=1 // pred_region
      %s125 = ssub.s32 512, 512
      %126 = vsyncadd [#allocation19], %s125
      %s127 = sshll.u32 [#allocation18], 4
      %s128 = int_to_ptr.vmem [resolvable:$true] %s127
      %133 = dma.hbm_to_vmem [thread:$0]  %s9, 512, %s128, [#allocation19], 64, 64, 4
    $region41: #{tpu_custom_call.1} parent=1 // pred_fallthru
      _
    // Predicated region
    $region42: #{tpu_custom_call.1} parent=1 // pred_check
      _
    $region43: #{tpu_custom_call.1} parent=1 // pred_check_branch
      %135 = sbr.rel (0) target = $region45
    $region44: #{tpu_custom_call.1} parent=1 // pred_region
      %s137 = ssub.s32 16, 16
      %138 = vsyncadd [#allocation19], %s137
      %s140 = sshll.u32 [#allocation20], 4
      %s141 = int_to_ptr.vmem [resolvable:$true] %s140
      %143 = dma.hbm_to_vmem [thread:$0]  %s10, 16, %s141, [#allocation19]
    $region45: #{tpu_custom_call.1} parent=1 // pred_fallthru
      _
    // Predicated region
    $region46: #{tpu_custom_call.1} parent=1 // pred_check
      _
    $region47: #{tpu_custom_call.1} parent=1 // pred_check_branch
      %145 = sbr.rel (0) target = $region49
    $region48: #{tpu_custom_call.1} parent=1 // pred_region
      %s147 = ssub.s32 256, 256
      %148 = vsyncadd [#allocation22], %s147
      %s149 = sshll.u32 [#allocation21], 4
      %s150 = int_to_ptr.vmem [resolvable:$true] %s149
      %155 = dma.hbm_to_vmem [thread:$0]  %s11, 256, %s150, [#allocation22], 64, 64, 4
    $region49: #{tpu_custom_call.1} parent=1 // pred_fallthru
      _
    // Predicated region
    $region50: #{tpu_custom_call.1} parent=1 // pred_check
      _
    $region51: #{tpu_custom_call.1} parent=1 // pred_check_branch
      %157 = sbr.rel (0) target = $region53
    $region52: #{tpu_custom_call.1} parent=1 // pred_region
      %s159 = ssub.s32 16, 16
      %160 = vsyncadd [#allocation22], %s159
      %s162 = sshll.u32 [#allocation23], 4
      %s163 = int_to_ptr.vmem [resolvable:$true] %s162
      %165 = dma.hbm_to_vmem [thread:$0]  %s12, 16, %s163, [#allocation22]
    $region53: #{tpu_custom_call.1} parent=1 // pred_fallthru
      _
    // Predicated region
    $region54: #{tpu_custom_call.1} parent=1 // pred_check
      _
    $region55: #{tpu_custom_call.1} parent=1 // pred_check_branch
      %167 = sbr.rel (0) target = $region57
    $region56: #{tpu_custom_call.1} parent=1 // pred_region
      %168 = dma.done [#allocation4], 256
    $region57: #{tpu_custom_call.1} parent=1 // pred_fallthru
      _
    // Predicated region
    $region58: #{tpu_custom_call.1} parent=1 // pred_check
      _
    $region59: #{tpu_custom_call.1} parent=1 // pred_check_branch
      %170 = sbr.rel (0) target = $region61
    $region60: #{tpu_custom_call.1} parent=1 // pred_region
      %171 = dma.done [#allocation7], 16
    $region61: #{tpu_custom_call.1} parent=1 // pred_fallthru
      _
    // Predicated region
    $region62: #{tpu_custom_call.1} parent=1 // pred_check
      _
    $region63: #{tpu_custom_call.1} parent=1 // pred_check_branch
      %173 = sbr.rel (0) target = $region65
    $region64: #{tpu_custom_call.1} parent=1 // pred_region
      %174 = dma.done [#allocation7], 16
    $region65: #{tpu_custom_call.1} parent=1 // pred_fallthru
      _
    // Predicated region
    $region66: #{tpu_custom_call.1} parent=1 // pred_check
      _
    $region67: #{tpu_custom_call.1} parent=1 // pred_check_branch
      %176 = sbr.rel (0) target = $region69
    $region68: #{tpu_custom_call.1} parent=1 // pred_region
      %177 = dma.done [#allocation10], 128
    $region69: #{tpu_custom_call.1} parent=1 // pred_fallthru
      _
    // Predicated region
    $region70: #{tpu_custom_call.1} parent=1 // pred_check
      _
    $region71: #{tpu_custom_call.1} parent=1 // pred_check_branch
      %179 = sbr.rel (0) target = $region73
    $region72: #{tpu_custom_call.1} parent=1 // pred_region
      %180 = dma.done [#allocation10], 256
    $region73: #{tpu_custom_call.1} parent=1 // pred_fallthru
      _
    // Predicated region
    $region74: #{tpu_custom_call.1} parent=1 // pred_check
      _
    $region75: #{tpu_custom_call.1} parent=1 // pred_check_branch
      %182 = sbr.rel (0) target = $region77
    $region76: #{tpu_custom_call.1} parent=1 // pred_region
      %183 = dma.done [#allocation13], 64
    $region77: #{tpu_custom_call.1} parent=1 // pred_fallthru
      _
    // Predicated region
    $region78: #{tpu_custom_call.1} parent=1 // pred_check
      _
    $region79: #{tpu_custom_call.1} parent=1 // pred_check_branch
      %185 = sbr.rel (0) target = $region81
    $region80: #{tpu_custom_call.1} parent=1 // pred_region
      %186 = dma.done [#allocation13], 128
    $region81: #{tpu_custom_call.1} parent=1 // pred_fallthru
      _
    // Predicated region
    $region82: #{tpu_custom_call.1} parent=1 // pred_check
      _
    $region83: #{tpu_custom_call.1} parent=1 // pred_check_branch
      %188 = sbr.rel (0) target = $region85
    $region84: #{tpu_custom_call.1} parent=1 // pred_region
      %189 = dma.done [#allocation16], 16
    $region85: #{tpu_custom_call.1} parent=1 // pred_fallthru
      _
    // Predicated region
    $region86: #{tpu_custom_call.1} parent=1 // pred_check
      _
    $region87: #{tpu_custom_call.1} parent=1 // pred_check_branch
      %191 = sbr.rel (0) target = $region89
    $region88: #{tpu_custom_call.1} parent=1 // pred_region
      %192 = dma.done [#allocation16], 16
    $region89: #{tpu_custom_call.1} parent=1 // pred_fallthru
      _
    // Predicated region
    $region90: #{tpu_custom_call.1} parent=1 // pred_check
      _
    $region91: #{tpu_custom_call.1} parent=1 // pred_check_branch
      %194 = sbr.rel (0) target = $region93
    $region92: #{tpu_custom_call.1} parent=1 // pred_region
      %195 = dma.done [#allocation19], 512
    $region93: #{tpu_custom_call.1} parent=1 // pred_fallthru
      _
    // Predicated region
    $region94: #{tpu_custom_call.1} parent=1 // pred_check
      _
    $region95: #{tpu_custom_call.1} parent=1 // pred_check_branch
      %197 = sbr.rel (0) target = $region97
    $region96: #{tpu_custom_call.1} parent=1 // pred_region
      %198 = dma.done [#allocation19], 16
    $region97: #{tpu_custom_call.1} parent=1 // pred_fallthru
      _
    // Predicated region
    $region98: #{tpu_custom_call.1} parent=1 // pred_check
      _
    $region99: #{tpu_custom_call.1} parent=1 // pred_check_branch
      %200 = sbr.rel (0) target = $region101
    $region100: #{tpu_custom_call.1} parent=1 // pred_region
      %201 = dma.done [#allocation22], 256
    $region101: #{tpu_custom_call.1} parent=1 // pred_fallthru
      _
    // Predicated region
    $region102: #{tpu_custom_call.1} parent=1 // pred_check
      _
    $region103: #{tpu_custom_call.1} parent=1 // pred_check_branch
      %203 = sbr.rel (0) target = $region105
    $region104: #{tpu_custom_call.1} parent=1 // pred_region
      %204 = dma.done [#allocation22], 16
    $region105: #{tpu_custom_call.1} parent=1 // pred_fallthru
      _
    %v206 = vld [vmem:[#allocation3] sm:$0xff]
    %v207 = vld [vmem:[#allocation3 + $0x8] sm:$0xff]
    %v208 = vld [vmem:[#allocation6] sm:$0x1]
    %v209 = vld [vmem:[#allocation8] sm:$0x1]
    %vm210 = vcmask 261120
    %v211 = vsel %vm210, %v206, 0.0
    %212 = vadd.xlane.f32.xlu0 %v211
    %v213 = vpop.xlane.xlu0 %212
    %v214 = vsel %vm210, %v207, 0.0
    %215 = vadd.xlane.f32.xlu0 %v214
    %v216 = vpop.xlane.xlu0 %215
    %v217 = vrcp.pop 32.0
    %v218 = vmul.f32 %v213, %v217
    %v219 = vmul.f32 %v216, %v217
    %v220 = vsub.f32 %v206, %v218
    %v221 = vsub.f32 %v207, %v219
    %v222 = vmul.f32 %v220, %v220
    %v223 = vmul.f32 %v221, %v221
    %v224 = vsel %vm210, %v222, 0.0
    %225 = vadd.xlane.f32.xlu0 %v224
    %v226 = vpop.xlane.xlu0 %225
    %v227 = vsel %vm210, %v223, 0.0
    %228 = vadd.xlane.f32.xlu0 %v227
    %v229 = vpop.xlane.xlu0 %228
    %v230 = vmul.f32 %v226, %v217
    %v231 = vmul.f32 %v229, %v217
    %v232 = vadd.f32 %v230, 1e-05
    %v233 = vadd.f32 %v231, 1e-05
    %v234 = vrsqrt.pop %v232
    %v235 = vrsqrt.pop %v233
    %v236 = vmul.f32 %v220, %v234
    %v237 = vmul.f32 %v221, %v235
    %v239 = vlaneseq
    %v240 = vshrl.u32 %v239, 7
    %v241 = vsub.s32 0, %v240
    %v242 = vrot.slane %v208, %v241
    %v244 = vmul.f32 %v236, %v242
    %v245 = vmul.f32 %v237, %v242
    %v247 = vlaneseq
    %v248 = vshrl.u32 %v247, 7
    %v249 = vsub.s32 0, %v248
    %v250 = vrot.slane %v209, %v249
    %v252 = vadd.f32 %v244, %v250
    %v253 = vadd.f32 %v245, %v250
    %v254 = vpack.c.bf16 %v252, %v252
    %v255 = vpack.c.bf16 %v253, %v253
    %v256 = vld [vmem:[#allocation9] sm:$0xf]
    %v257 = vld [vmem:[#allocation9 + $0x4] sm:$0xf]
    %v258 = vld [vmem:[#allocation12] sm:$0xf]
    %v259 = vld [vmem:[#allocation11] sm:$0xff]
    %v260 = vld [vmem:[#allocation11 + $0x8] sm:$0xff]
    %v261 = vld [vmem:[#allocation14] sm:$0xff]
    %263 = vset.pattern.permute.xlu0 0
    %264 = vperm.xlu0 %263, %v259
    %v265 = vpop.permute.xlu0 %264
    %268 = vset.pattern.permute.xlu0 0
    %269 = vperm.xlu0 %268, %v260
    %v270 = vpop.permute.xlu0 %269
    %v274 = vunpack.c.l.b16 %v256
    %v275 = vunpack.c.l.b16 %v257
    %v276 = vpack.c.b16 %v275, %v274
    %vm277 = vcmask 64512
    %v279 = vsel %vm277, %v276, 0
    %vm281 = vcmask 1043456
    %v283 = vsel %vm281, %v254, 0
    %285 = vmatprep.subr.bf16.mxu0 0
    %286 = vmatpush1.bf16.msra.mxu0 %v283
    %287 = vmatprep.subr.bf16.mxu0 0
    %288 = vmatpush1.bf16.msra.mxu0 0
    %289 = vmatprep.subr.bf16.mxu0 0
    %290 = vmatpush1.bf16.msra.mxu0 0
    %291 = vmatprep.subr.bf16.mxu0 0
    %292 = vmatpush1.bf16.msra.mxu0 0
    %293 = vmatprep.subr.bf16.mxu0 0
    %294 = vmatpush1.bf16.msra.mxu0 0
    %295 = vmatprep.subr.bf16.mxu0 0
    %296 = vmatpush1.bf16.msra.mxu0 0
    %297 = vmatprep.subr.bf16.mxu0 0
    %298 = vmatpush1.bf16.msra.mxu0 0
    %299 = vmatprep.subr.bf16.mxu0 0
    %300 = vmatpush1.bf16.msra.mxu0 0
    %301 = vmatprep.subr.bf16.mxu0 0
    %302 = vmatpush1.bf16.msra.mxu0 0
    %303 = vmatprep.subr.bf16.mxu0 0
    %304 = vmatpush1.bf16.msra.mxu0 0
    %305 = vmatprep.subr.bf16.mxu0 0
    %306 = vmatpush1.bf16.msra.mxu0 0
    %307 = vmatprep.subr.bf16.mxu0 0
    %308 = vmatpush1.bf16.msra.mxu0 0
    %309 = vmatprep.subr.bf16.mxu0 0
    %310 = vmatpush1.bf16.msra.mxu0 0
    %311 = vmatprep.subr.bf16.mxu0 0
    %312 = vmatpush1.bf16.msra.mxu0 0
    %313 = vmatprep.subr.bf16.mxu0 0
    %314 = vmatpush1.bf16.msra.mxu0 0
    %315 = vmatprep.subr.bf16.mxu0 0
    %316 = vmatpush1.bf16.msra.mxu0 0
    %317 = vmatprep.mubr.bf16.mxu0 0
    %318 = vmatmul.mubr.bf16.gmra.mrb[0].mxu0 %v279
    %v319 = vpop.f32.mrb[0].mxu0
    %v320 = vadd.f32 %v265, %v319
    %v321 = vpop.f32.mrb[0].mxu0
    %v322 = vpop.f32.mrb[0].mxu0
    %v323 = vadd.f32 %v270, %v322
    %v324 = vpop.f32.mrb[0].mxu0
    %325 = vdwg.mxu0
    %v326 = vmul.f32 %v320, 0.5
    %v327 = vmul.f32 %v323, 0.5
    %v328 = vmul.f32 %v320, 0.70710677
    %v329 = vmul.f32 %v323, 0.70710677
    %v330 = verf.f32.pop %v328
    %v331 = verf.f32.pop %v329
    %v332 = vadd.f32 %v330, 1.0
    %v333 = vadd.f32 %v331, 1.0
    %v334 = vmul.f32 %v326, %v332
    %v335 = vmul.f32 %v327, %v333
    %v336 = vpack.c.bf16 %v335, %v334
    %338 = vset.pattern.permute.xlu0 0
    %339 = vperm.xlu0 %338, %v261
    %v340 = vpop.permute.xlu0 %339
    %vm342 = vcmask 130048
    %v344 = vsel %vm342, %v258, 0
    %346 = vmatprep.subr.bf16.mxu0 0
    %347 = vmatpush1.bf16.msra.mxu0 %v336
    %348 = vmatprep.subr.bf16.mxu0 0
    %349 = vmatpush1.bf16.msra.mxu0 0
    %350 = vmatprep.subr.bf16.mxu0 0
    %351 = vmatpush1.bf16.msra.mxu0 0
    %352 = vmatprep.subr.bf16.mxu0 0
    %353 = vmatpush1.bf16.msra.mxu0 0
    %354 = vmatprep.subr.bf16.mxu0 0
    %355 = vmatpush1.bf16.msra.mxu0 0
    %356 = vmatprep.subr.bf16.mxu0 0
    %357 = vmatpush1.bf16.msra.mxu0 0
    %358 = vmatprep.subr.bf16.mxu0 0
    %359 = vmatpush1.bf16.msra.mxu0 0
    %360 = vmatprep.subr.bf16.mxu0 0
    %361 = vmatpush1.bf16.msra.mxu0 0
    %362 = vmatprep.subr.bf16.mxu0 0
    %363 = vmatpush1.bf16.msra.mxu0 0
    %364 = vmatprep.subr.bf16.mxu0 0
    %365 = vmatpush1.bf16.msra.mxu0 0
    %366 = vmatprep.subr.bf16.mxu0 0
    %367 = vmatpush1.bf16.msra.mxu0 0
    %368 = vmatprep.subr.bf16.mxu0 0
    %369 = vmatpush1.bf16.msra.mxu0 0
    %370 = vmatprep.subr.bf16.mxu0 0
    %371 = vmatpush1.bf16.msra.mxu0 0
    %372 = vmatprep.subr.bf16.mxu0 0
    %373 = vmatpush1.bf16.msra.mxu0 0
    %374 = vmatprep.subr.bf16.mxu0 0
    %375 = vmatpush1.bf16.msra.mxu0 0
    %376 = vmatprep.subr.bf16.mxu0 0
    %377 = vmatpush1.bf16.msra.mxu0 0
    %378 = vmatprep.mubr.bf16.mxu0 0
    %379 = vmatmul.mubr.bf16.gmra.mrb[0].mxu0 %v344
    %v380 = vpop.f32.mrb[0].mxu0
    %v381 = vadd.f32 %v340, %v380
    %v382 = vpop.f32.mrb[0].mxu0
    %v383 = vpop.f32.mrb[0].mxu0
    %v384 = vpop.f32.mrb[0].mxu0
    %385 = vdwg.mxu0
    %v386 = vadd.f32 %v206, %v381
    %387 = vst.msk [vmem:[#allocation2] sm:$0xff] %vm210, %v386
    %v389 = vsel %vm281, %v255, 0
    %391 = vmatprep.subr.bf16.mxu0 0
    %392 = vmatpush1.bf16.msra.mxu0 %v389
    %393 = vmatprep.subr.bf16.mxu0 0
    %394 = vmatpush1.bf16.msra.mxu0 0
    %395 = vmatprep.subr.bf16.mxu0 0
    %396 = vmatpush1.bf16.msra.mxu0 0
    %397 = vmatprep.subr.bf16.mxu0 0
    %398 = vmatpush1.bf16.msra.mxu0 0
    %399 = vmatprep.subr.bf16.mxu0 0
    %400 = vmatpush1.bf16.msra.mxu0 0
    %401 = vmatprep.subr.bf16.mxu0 0
    %402 = vmatpush1.bf16.msra.mxu0 0
    %403 = vmatprep.subr.bf16.mxu0 0
    %404 = vmatpush1.bf16.msra.mxu0 0
    %405 = vmatprep.subr.bf16.mxu0 0
    %406 = vmatpush1.bf16.msra.mxu0 0
    %407 = vmatprep.subr.bf16.mxu0 0
    %408 = vmatpush1.bf16.msra.mxu0 0
    %409 = vmatprep.subr.bf16.mxu0 0
    %410 = vmatpush1.bf16.msra.mxu0 0
    %411 = vmatprep.subr.bf16.mxu0 0
    %412 = vmatpush1.bf16.msra.mxu0 0
    %413 = vmatprep.subr.bf16.mxu0 0
    %414 = vmatpush1.bf16.msra.mxu0 0
    %415 = vmatprep.subr.bf16.mxu0 0
    %416 = vmatpush1.bf16.msra.mxu0 0
    %417 = vmatprep.subr.bf16.mxu0 0
    %418 = vmatpush1.bf16.msra.mxu0 0
    %419 = vmatprep.subr.bf16.mxu0 0
    %420 = vmatpush1.bf16.msra.mxu0 0
    %421 = vmatprep.subr.bf16.mxu0 0
    %422 = vmatpush1.bf16.msra.mxu0 0
    %423 = vmatprep.mubr.bf16.mxu0 0
    %424 = vmatmul.mubr.bf16.gmra.mrb[0].mxu0 %v279
    %v425 = vpop.f32.mrb[0].mxu0
    %v426 = vadd.f32 %v265, %v425
    %v427 = vpop.f32.mrb[0].mxu0
    %v428 = vpop.f32.mrb[0].mxu0
    %v429 = vadd.f32 %v270, %v428
    %v430 = vpop.f32.mrb[0].mxu0
    %431 = vdwg.mxu0
    %v432 = vmul.f32 %v426, 0.5
    %v433 = vmul.f32 %v429, 0.5
    %v434 = vmul.f32 %v426, 0.70710677
    %v435 = vmul.f32 %v429, 0.70710677
    %v436 = verf.f32.pop %v434
    %v437 = verf.f32.pop %v435
    %v438 = vadd.f32 %v436, 1.0
    %v439 = vadd.f32 %v437, 1.0
    %v440 = vmul.f32 %v432, %v438
    %v441 = vmul.f32 %v433, %v439
    %v442 = vpack.c.bf16 %v441, %v440
    %443 = vmatprep.subr.bf16.mxu0 0
    %444 = vmatpush1.bf16.msra.mxu0 %v442
    %445 = vmatprep.subr.bf16.mxu0 0
    %446 = vmatpush1.bf16.msra.mxu0 0
    %447 = vmatprep.subr.bf16.mxu0 0
    %448 = vmatpush1.bf16.msra.mxu0 0
    %449 = vmatprep.subr.bf16.mxu0 0
    %450 = vmatpush1.bf16.msra.mxu0 0
    %451 = vmatprep.subr.bf16.mxu0 0
    %452 = vmatpush1.bf16.msra.mxu0 0
    %453 = vmatprep.subr.bf16.mxu0 0
    %454 = vmatpush1.bf16.msra.mxu0 0
    %455 = vmatprep.subr.bf16.mxu0 0
    %456 = vmatpush1.bf16.msra.mxu0 0
    %457 = vmatprep.subr.bf16.mxu0 0
    %458 = vmatpush1.bf16.msra.mxu0 0
    %459 = vmatprep.subr.bf16.mxu0 0
    %460 = vmatpush1.bf16.msra.mxu0 0
    %461 = vmatprep.subr.bf16.mxu0 0
    %462 = vmatpush1.bf16.msra.mxu0 0
    %463 = vmatprep.subr.bf16.mxu0 0
    %464 = vmatpush1.bf16.msra.mxu0 0
    %465 = vmatprep.subr.bf16.mxu0 0
    %466 = vmatpush1.bf16.msra.mxu0 0
    %467 = vmatprep.subr.bf16.mxu0 0
    %468 = vmatpush1.bf16.msra.mxu0 0
    %469 = vmatprep.subr.bf16.mxu0 0
    %470 = vmatpush1.bf16.msra.mxu0 0
    %471 = vmatprep.subr.bf16.mxu0 0
    %472 = vmatpush1.bf16.msra.mxu0 0
    %473 = vmatprep.subr.bf16.mxu0 0
    %474 = vmatpush1.bf16.msra.mxu0 0
    %475 = vmatprep.mubr.bf16.mxu0 0
    %476 = vmatmul.mubr.bf16.gmra.mrb[0].mxu0 %v344
    %v477 = vpop.f32.mrb[0].mxu0
    %v478 = vadd.f32 %v340, %v477
    %v479 = vpop.f32.mrb[0].mxu0
    %v480 = vpop.f32.mrb[0].mxu0
    %v481 = vpop.f32.mrb[0].mxu0
    %482 = vdwg.mxu0
    %v483 = vadd.f32 %v207, %v478
    %s484 = scalar_lea.vmem [#allocation2], 8
    %485 = vst.msk [vmem:[%s484] sm:$0xff] %vm210, %v483
    %v486 = vld [vmem:[#allocation2] sm:$0xff]
    %v487 = vld [vmem:[#allocation2 + $0x8] sm:$0xff]
    %v488 = vld [vmem:[#allocation15] sm:$0x1]
    %v489 = vld [vmem:[#allocation17] sm:$0x1]
    %v490 = vsel %vm210, %v486, 0.0
    %491 = vadd.xlane.f32.xlu0 %v490
    %v492 = vpop.xlane.xlu0 %491
    %v493 = vsel %vm210, %v487, 0.0
    %494 = vadd.xlane.f32.xlu0 %v493
    %v495 = vpop.xlane.xlu0 %494
    %v496 = vmul.f32 %v492, %v217
    %v497 = vmul.f32 %v495, %v217
    %v498 = vsub.f32 %v486, %v496
    %v499 = vsub.f32 %v487, %v497
    %v500 = vmul.f32 %v498, %v498
    %v501 = vmul.f32 %v499, %v499
    %v502 = vsel %vm210, %v500, 0.0
    %503 = vadd.xlane.f32.xlu0 %v502
    %v504 = vpop.xlane.xlu0 %503
    %v505 = vsel %vm210, %v501, 0.0
    %506 = vadd.xlane.f32.xlu0 %v505
    %v507 = vpop.xlane.xlu0 %506
    %v508 = vmul.f32 %v504, %v217
    %v509 = vmul.f32 %v507, %v217
    %v510 = vadd.f32 %v508, 1e-05
    %v511 = vadd.f32 %v509, 1e-05
    %v512 = vrsqrt.pop %v510
    %v513 = vrsqrt.pop %v511
    %v514 = vmul.f32 %v498, %v512
    %v515 = vmul.f32 %v499, %v513
    %v517 = vlaneseq
    %v518 = vshrl.u32 %v517, 7
    %v519 = vsub.s32 0, %v518
    %v520 = vrot.slane %v488, %v519
    %v522 = vmul.f32 %v514, %v520
    %v523 = vmul.f32 %v515, %v520
    %v525 = vlaneseq
    %v526 = vshrl.u32 %v525, 7
    %v527 = vsub.s32 0, %v526
    %v528 = vrot.slane %v489, %v527
    %v530 = vadd.f32 %v522, %v528
    %v531 = vadd.f32 %v523, %v528
    %v532 = vpack.c.bf16 %v531, %v530
    %v533 = vld [vmem:[#allocation18] sm:$0xf]
    %v534 = vld [vmem:[#allocation18 + $0x4] sm:$0xf]
    %v535 = vld [vmem:[#allocation18 + $0x8] sm:$0xf]
    %v536 = vld [vmem:[#allocation18 + $0xc] sm:$0xf]
    %v537 = vld [vmem:[#allocation18 + $0x10] sm:$0xf]
    %v538 = vld [vmem:[#allocation18 + $0x14] sm:$0xf]
    %v539 = vld [vmem:[#allocation18 + $0x18] sm:$0xf]
    %v540 = vld [vmem:[#allocation18 + $0x1c] sm:$0xf]
    %v541 = vld [vmem:[#allocation20] sm:$0x1]
    %v543 = vlaneseq
    %v544 = vshrl.u32 %v543, 7
    %v545 = vsub.s32 0, %v544
    %v546 = vrot.slane %v541, %v545
    %v556 = vunpack.c.l.b16 %v533
    %v557 = vunpack.c.l.b16 %v534
    %v558 = vunpack.c.l.b16 %v535
    %v559 = vunpack.c.l.b16 %v536
    %v560 = vunpack.c.l.b16 %v537
    %v561 = vunpack.c.l.b16 %v538
    %v562 = vunpack.c.l.b16 %v539
    %v563 = vunpack.c.l.b16 %v540
    %v564 = vpack.c.b16 %v557, %v556
    %v565 = vpack.c.b16 %v559, %v558
    %v566 = vpack.c.b16 %v561, %v560
    %v567 = vpack.c.b16 %v563, %v562
    %v569 = vsel %vm210, %v532, 0
    %v572 = vsel %vm210, %v564, 0
    %v575 = vsel %vm210, %v565, 0
    %v578 = vsel %vm210, %v566, 0
    %v581 = vsel %vm210, %v567, 0
    %583 = vmatprep.subr.bf16.mxu0 0
    %584 = vmatpush1.bf16.xpose.msra.mxu0 %v572
    %585 = vmatprep.subr.bf16.mxu0 0
    %586 = vmatpush1.bf16.xpose.msra.mxu0 %v575
    %587 = vmatprep.subr.bf16.mxu0 0
    %588 = vmatpush1.bf16.xpose.msra.mxu0 %v578
    %589 = vmatprep.subr.bf16.mxu0 0
    %590 = vmatpush1.bf16.xpose.msra.mxu0 %v581
    %591 = vmatprep.subr.bf16.mxu0 0
    %592 = vmatpush1.bf16.xpose.msra.mxu0 0
    %593 = vmatprep.subr.bf16.mxu0 0
    %594 = vmatpush1.bf16.xpose.msra.mxu0 0
    %595 = vmatprep.subr.bf16.mxu0 0
    %596 = vmatpush1.bf16.xpose.msra.mxu0 0
    %597 = vmatprep.subr.bf16.mxu0 0
    %598 = vmatpush1.bf16.xpose.msra.mxu0 0
    %599 = vmatprep.subr.bf16.mxu0 0
    %600 = vmatpush1.bf16.xpose.msra.mxu0 0
    %601 = vmatprep.subr.bf16.mxu0 0
    %602 = vmatpush1.bf16.xpose.msra.mxu0 0
    %603 = vmatprep.subr.bf16.mxu0 0
    %604 = vmatpush1.bf16.xpose.msra.mxu0 0
    %605 = vmatprep.subr.bf16.mxu0 0
    %606 = vmatpush1.bf16.xpose.msra.mxu0 0
    %607 = vmatprep.subr.bf16.mxu0 0
    %608 = vmatpush1.bf16.xpose.msra.mxu0 0
    %609 = vmatprep.subr.bf16.mxu0 0
    %610 = vmatpush1.bf16.xpose.msra.mxu0 0
    %611 = vmatprep.subr.bf16.mxu0 0
    %612 = vmatpush1.bf16.xpose.msra.mxu0 0
    %613 = vmatprep.subr.bf16.mxu0 0
    %614 = vmatpush1.bf16.xpose.msra.mxu0 0
    %615 = vmatprep.mubr.bf16.mxu0 0
    %616 = vmatmul.mubr.bf16.gmra.mrb[0].mxu0 %v569
    %v617 = vpop.f32.mrb[0].mxu0
    %v618 = vadd.f32 %v546, %v617
    %v619 = vpop.f32.mrb[0].mxu0
    %v620 = vpop.f32.mrb[0].mxu0
    %v621 = vadd.f32 %v546, %v620
    %v622 = vpop.f32.mrb[0].mxu0
    %623 = vdwg.mxu0
    %v624 = vmul.f32 %v618, 0.5
    %v625 = vmul.f32 %v621, 0.5
    %v626 = vmul.f32 %v618, 0.70710677
    %v627 = vmul.f32 %v621, 0.70710677
    %v628 = verf.f32.pop %v626
    %v629 = verf.f32.pop %v627
    %v630 = vadd.f32 %v628, 1.0
    %v631 = vadd.f32 %v629, 1.0
    %v632 = vmul.f32 %v624, %v630
    %v633 = vmul.f32 %v625, %v631
    %v634 = vpack.c.bf16 %v633, %v632
    %v635 = vld [vmem:[#allocation21] sm:$0xf]
    %v636 = vld [vmem:[#allocation21 + $0x4] sm:$0xf]
    %v637 = vld [vmem:[#allocation21 + $0x8] sm:$0xf]
    %v638 = vld [vmem:[#allocation21 + $0xc] sm:$0xf]
    %v639 = vld [vmem:[#allocation23] sm:$0x1]
    %v641 = vlaneseq
    %v642 = vshrl.u32 %v641, 7
    %v643 = vsub.s32 0, %v642
    %v644 = vrot.slane %v639, %v643
    %v650 = vunpack.c.l.b16 %v635
    %v651 = vunpack.c.l.b16 %v636
    %v652 = vunpack.c.l.b16 %v637
    %v653 = vunpack.c.l.b16 %v638
    %v654 = vpack.c.b16 %v651, %v650
    %v655 = vpack.c.b16 %v653, %v652
    %vm656 = vcmask 523264
    %v658 = vsel %vm656, %v634, 0
    %v661 = vsel %vm656, %v654, 0
    %v664 = vsel %vm656, %v655, 0
    %666 = vmatprep.subr.bf16.mxu0 0
    %667 = vmatpush1.bf16.xpose.msra.mxu0 %v661
    %668 = vmatprep.subr.bf16.mxu0 0
    %669 = vmatpush1.bf16.xpose.msra.mxu0 %v664
    %670 = vmatprep.subr.bf16.mxu0 0
    %671 = vmatpush1.bf16.xpose.msra.mxu0 0
    %672 = vmatprep.subr.bf16.mxu0 0
    %673 = vmatpush1.bf16.xpose.msra.mxu0 0
    %674 = vmatprep.subr.bf16.mxu0 0
    %675 = vmatpush1.bf16.xpose.msra.mxu0 0
    %676 = vmatprep.subr.bf16.mxu0 0
    %677 = vmatpush1.bf16.xpose.msra.mxu0 0
    %678 = vmatprep.subr.bf16.mxu0 0
    %679 = vmatpush1.bf16.xpose.msra.mxu0 0
    %680 = vmatprep.subr.bf16.mxu0 0
    %681 = vmatpush1.bf16.xpose.msra.mxu0 0
    %682 = vmatprep.subr.bf16.mxu0 0
    %683 = vmatpush1.bf16.xpose.msra.mxu0 0
    %684 = vmatprep.subr.bf16.mxu0 0
    %685 = vmatpush1.bf16.xpose.msra.mxu0 0
    %686 = vmatprep.subr.bf16.mxu0 0
    %687 = vmatpush1.bf16.xpose.msra.mxu0 0
    %688 = vmatprep.subr.bf16.mxu0 0
    %689 = vmatpush1.bf16.xpose.msra.mxu0 0
    %690 = vmatprep.subr.bf16.mxu0 0
    %691 = vmatpush1.bf16.xpose.msra.mxu0 0
    %692 = vmatprep.subr.bf16.mxu0 0
    %693 = vmatpush1.bf16.xpose.msra.mxu0 0
    %694 = vmatprep.subr.bf16.mxu0 0
    %695 = vmatpush1.bf16.xpose.msra.mxu0 0
    %696 = vmatprep.subr.bf16.mxu0 0
    %697 = vmatpush1.bf16.xpose.msra.mxu0 0
    %698 = vmatprep.mubr.bf16.mxu0 0
    %699 = vmatmul.mubr.bf16.gmra.mrb[0].mxu0 %v658
    %v700 = vpop.f32.mrb[0].mxu0
    %v701 = vadd.f32 %v644, %v700
    %v702 = vpop.f32.mrb[0].mxu0
    %v703 = vpop.f32.mrb[0].mxu0
    %v704 = vadd.f32 %v644, %v703
    %v705 = vpop.f32.mrb[0].mxu0
    %706 = vdwg.mxu0
    %v707 = vadd.f32 %v486, %v701
    %v708 = vadd.f32 %v487, %v704
    %709 = vst.msk [vmem:[#allocation24] sm:$0xff] %vm210, %v707
    %710 = vst.msk [vmem:[#allocation24 + $0x8] sm:$0xff] %vm210, %v708
    // Predicated region
    $region106: #{tpu_custom_call.1} parent=1 // pred_check
      _
    $region107: #{tpu_custom_call.1} parent=1 // pred_check_branch
      %712 = sbr.rel (0) target = $region109
    $region108: #{tpu_custom_call.1} parent=1 // pred_region
      %s714 = ssub.s32 256, 256
      %715 = vsyncadd [#allocation5], %s714
      %s716 = sshll.u32 [#allocation24], 4
      %s717 = int_to_ptr.vmem [resolvable:$true] %s716
      %722 = dma.vmem_to_hbm [thread:$0]  %s717, 256, %s13, [#allocation5], 128, 128, 8
    $region109: #{tpu_custom_call.1} parent=1 // pred_fallthru
      _
    // Predicated region
    $region110: #{tpu_custom_call.1} parent=1 // pred_check
      _
    $region111: #{tpu_custom_call.1} parent=1 // pred_check_branch
      %724 = sbr.rel (0) target = $region113
    $region112: #{tpu_custom_call.1} parent=1 // pred_region
      %725 = dma.done [#allocation5], 256
    $region113: #{tpu_custom_call.1} parent=1 // pred_fallthru
      _
    %726 = vsyncpa [#allocation4], 1
    %727 = vsyncpa [#allocation7], 1
    %728 = vsyncpa [#allocation10], 1
    %729 = vsyncpa [#allocation13], 1
    %730 = vsyncpa [#allocation16], 1
    %731 = vsyncpa [#allocation19], 1
    %732 = vsyncpa [#allocation22], 1
    %733 = vsyncpa [#allocation5], 1

</llo_original>
